<compile_context>
chip_gen: v6e
topology: v6e:2x2x1
jax: 0.10.0
libtpu: 0.0.40
codegen_flags: <defaults>
</compile_context>

<pallas_src>
import jax
import jax.numpy as jnp
import numpy as np
from jax.experimental import pallas as pl
from jax.experimental.pallas import tpu as pltpu


def _round_up(n, m):
    return ((n + m - 1) // m) * m


def _fmfm_kernel(xf_ref, w_ref, seg_ref, o_ref):
    # xf_ref: (TB, FD) bf16   w_ref: (FD, FD) bf16   seg_ref: (F, FD) f32   o_ref: (F, TB)
    xf = xf_ref[...]                                                     # bf16, fed straight to MXU

    # t[b, i*D+d] = sum_{j>i, e} x[b, j, e] * M[i, j, d, e]   (mask baked into W)
    t = jnp.dot(xf, w_ref[...], preferred_element_type=jnp.float32)     # (TB, FD) f32, MXU

    prod = xf * t                                                        # bf16*f32 -> f32, VPU

    # out[i, b] = sum_d prod[b, i*D+d] -- segment reduce as a small matmul; result is already
    # (F, TB) so the store is lane-dense along the batch-tile axis.
    # TODO(synk): on v7x this second MXU stream can become the binding cost after the bandwidth
    # fixes; if bundle dumps show vmatmul-bound there, swap it for an XLU reshape+sum over D.
    o_ref[...] = jax.lax.dot_general(
        seg_ref[...], prod,
        dimension_numbers=(((1,), (1,)), ((), ())),
        preferred_element_type=jnp.float32,
    ).astype(o_ref.dtype)                                                # (F, TB) lane-dense store


def _choose_batch_tile(B, FD, batch_tile):
    """Pick rows-per-grid-step: big, lane-aligned, VMEM-safe, and >=2 steps on large B."""
    if B <= 128:
        return _round_up(max(B, 1), 8)                 # tiny batch: one small tile
    bt_max = max(128, (batch_tile // 128) * 128)       # lane-aligned target (output lane dim = bt)
    # VMEM cap: keep the per-tile working set (double-buffered bf16 xf + f32 t/prod) well under
    # v7x's 64 MiB physical VMEM and everyone's scoped defaults.
    bt_cap = max(128, ((20 << 20) // (FD * 16)) // 128 * 128)
    bt = min(bt_max, bt_cap, _round_up(B, 128))
    # Prefer grid >= 2 once each half still has >= 512 rows, so the ("parallel",) grid axis can
    # shard across v7x's two TensorCores; costs only ~0.35us of extra step overhead on 1-TC chips.
    if B >= 1024:
        bt = min(bt, max(_round_up(pl.cdiv(B, 2), 128), 512))
    return bt


def fmfm_prepare(matrix):
    """Static per-parameter prep (hoist out of the hot path; `matrix` is a fixed parameter)."""
    F, F2, D, D2 = matrix.shape
    assert F == F2 and D == D2
    FD = F * D
    mask = jnp.triu(jnp.ones((F, F), matrix.dtype), 1)                   # strict upper triangle, j > i
    m_masked = matrix * mask[:, :, None, None]                           # (i, j, d, e)
    W = jnp.transpose(m_masked, (1, 3, 0, 2)).reshape(FD, FD)            # W[j*D+e, i*D+d]
    W = W.astype(jnp.bfloat16)                                           # MXU rounds to bf16 anyway
    seg = jnp.repeat(jnp.eye(F, dtype=jnp.float32), D, axis=1)           # (F, FD): seg[i, i*D+d] = 1
    return W, seg


def fmfm_apply(x, W, seg, *, batch_tile=1024):
    """x: (B, F, D) + precomputed (W, seg) -> (B, F)   (matches FmFMTransform.forward)."""
    B, F, D = x.shape
    FD = F * D
    assert W.shape == (FD, FD) and seg.shape == (F, FD)

    bt = _choose_batch_tile(B, FD, batch_tile)
    grid = pl.cdiv(B, bt)
    Bp = grid * bt

    # xf is the only large streamed operand: ship it as bf16 (halves HBM bytes of the stream).
    xf = x.reshape(B, FD).astype(jnp.bfloat16)
    if grid == 1 and Bp != B:
        # Single-tile path: cheaply pad the (small) batch so the block matches the array exactly
        # and the output lane dim stays 128-aligned / full-dim.
        xf = jnp.pad(xf, ((0, Bp - B), (0, 0)))
    # Multi-tile path: NO wrapper-side pad. The last input block simply overhangs the end of xf;
    # the resulting garbage only affects output COLUMNS >= B (each output column depends solely on
    # its own batch row) and those are sliced off below. Do not add any cross-batch coupling to
    # the kernel without restoring the pad.

    cost = pl.CostEstimate(
        flops=2 * Bp * FD * FD + 2 * Bp * F * FD + Bp * FD,
        transcendentals=0,
        bytes_accessed=Bp * FD * 2 + FD * FD * 2 + F * FD * 4 + F * Bp * 4,
    )

    # Explicit scoped-VMEM budget: double-buffered bf16 xf tiles + f32 t/prod intermediates +
    # resident W/seg + output tiles, with 2x headroom; floor 32 MiB (raises v5e's 16 MiB default),
    # ceiling 48 MiB (leaves headroom inside v7x's 64 MiB physical VMEM).
    vmem_est = (2 * bt * FD * 2 + 2 * FD * FD * 2 + 2 * F * FD * 4
                + 2 * F * bt * 4 + 3 * bt * FD * 4)
    vmem_limit = int(min(max(2 * vmem_est, 32 << 20), 48 << 20))

    # TODO(synk): for large F*D (>~2048) the resident (FD, FD) W no longer fits VMEM; tile W along
    # K with an "arbitrary" reduction axis + f32 accumulator and skip the zero lower-tri blocks.
    out_ft = pl.pallas_call(
        _fmfm_kernel,
        out_shape=jax.ShapeDtypeStruct((F, Bp), x.dtype),
        grid=(grid,),
        in_specs=[
            pl.BlockSpec((bt, FD), lambda b: (b, 0)),                    # streamed xflat batch tile
            pl.BlockSpec((FD, FD), lambda b: (0, 0)),                    # masked weight, VMEM-resident
            pl.BlockSpec((F, FD), lambda b: (0, 0)),                     # segment-sum matrix, resident
        ],
        out_specs=pl.BlockSpec((F, bt), lambda b: (0, b)),               # (F, TB): lane dim = batch tile
        compiler_params=pltpu.CompilerParams(
            dimension_semantics=("parallel",),
            vmem_limit_bytes=vmem_limit,
        ),
        cost_estimate=cost,
    )(xf, W, seg)

    return out_ft[:, :B].T                                               # (B, F)


def fmfm_transform(x, matrix, *, batch_tile=1024):
    """Convenience wrapper: x (B, F, D), matrix (F, F, D, D) -> (B, F).

    Prefer fmfm_prepare()/fmfm_apply() so the static W/seg prep runs once per parameter."""
    W, seg = fmfm_prepare(matrix)
    return fmfm_apply(x, W, seg, batch_tile=batch_tile)


def _reference(x, matrix):
    # Direct transcription of the PyTorch forward (B > 1, F > 1 so .squeeze() -> (B, F, F)).
    F = x.shape[1]
    mask = jnp.triu(jnp.ones((F, F), x.dtype), 1)
    m = matrix * mask[:, :, None, None]
    trans = jnp.einsum('bid,ijde->bije', x, m,
                       precision=jax.lax.Precision.HIGHEST)              # (B, F, F, D)
    result = jnp.einsum('bije,bje->bij', trans, x,
                        precision=jax.lax.Precision.HIGHEST)             # (B, F, F)
    return jnp.sum(result, axis=2)                                       # (B, F)


if __name__ == "__main__":
    F, D = 8, 32          # featureNumb, dim
    key = jax.random.PRNGKey(0)
    kx, km = jax.random.split(key)

    # nn.init.normal_(mean=0, std=0.001) on a (F, F, D, D) parameter
    matrix = 0.001 * jax.random.normal(km, (F, F, D, D), dtype=jnp.float32)

    # Static prep hoisted once (matrix is a fixed parameter).
    W, seg = fmfm_prepare(matrix)

    # Three configs:
    #   B=16               -> tiny single-tile path
    #   B=300 (default)    -> single big padded tile
    #   B=300, tile=128    -> multi-step grid, un-padded input with boundary overhang
    for B, tile in ((16, 1024), (300, 1024), (300, 128)):
        x = jax.random.normal(jax.random.fold_in(kx, B), (B, F, D), dtype=jnp.float32)

        out = fmfm_apply(x, W, seg, batch_tile=tile)
        out = jax.block_until_ready(out)

        ref = _reference(x, matrix)
        assert out.shape == (B, F)
        # Kernel operands are shipped/rounded to bf16 (MXU-native) -> looser tolerance.
        np.testing.assert_allclose(np.asarray(out), np.asarray(ref), atol=1e-2, rtol=2e-2)

    # TODO(synk): PyTorch's .squeeze() changes the output rank when B == 1 or F == 1;
    # this kernel assumes B > 1 and F > 1 (the normal case) and always returns (B, F).
    print("KERNEL_OK")
</pallas_src>

<mosaic_0001>
module attributes {stable_mosaic.version = 11 : i64} {
  func.func @_fmfm_kernel(%arg0: i32, %arg1: memref<16x256xbf16, #tpu.memory_space<vmem>>, %arg2: memref<256x256xbf16, #tpu.memory_space<vmem>>, %arg3: memref<8x256xf32, #tpu.memory_space<vmem>>, %arg4: memref<8x16xf32, #tpu.memory_space<vmem>>) attributes {dimension_semantics = [#tpu.dimension_semantics<parallel>], iteration_bounds = array<i64: 1>, scalar_prefetch = 0 : i64, scratch_operands = 0 : i64, tpu.core_type = #tpu.core_type<tc>, window_params = [{transform_indices = @transform_0, window_bounds = array<i64: 16, 256>}, {pipeline_mode = #tpu.pipeline_mode<synchronous>, transform_indices = @transform_1, window_bounds = array<i64: 256, 256>}, {pipeline_mode = #tpu.pipeline_mode<synchronous>, transform_indices = @transform_2, window_bounds = array<i64: 8, 256>}, {transform_indices = @transform_3, window_bounds = array<i64: 8, 16>}]} {
    %c0 = arith.constant 0 : index
    %c0_0 = arith.constant 0 : index
    %0 = vector.load %arg1[%c0, %c0_0] : memref<16x256xbf16, #tpu.memory_space<vmem>>, vector<16x256xbf16>
    %c0_1 = arith.constant 0 : index
    %c0_2 = arith.constant 0 : index
    %1 = vector.load %arg2[%c0_1, %c0_2] : memref<256x256xbf16, #tpu.memory_space<vmem>>, vector<256x256xbf16>
    %cst = arith.constant dense<0.000000e+00> : vector<16x256xf32>
    %2 = tpu.matmul %0, %1, %cst {dimension_numbers = #tpu.dot_dimension_numbers<[1], [0], [0], [1], [0, 0, 1, 1], [], []>} : vector<16x256xbf16>, vector<256x256xbf16>, vector<16x256xf32> -> vector<16x256xf32>
    %3 = arith.extf %0 : vector<16x256xbf16> to vector<16x256xf32>
    %4 = arith.mulf %3, %2 : vector<16x256xf32>
    %c0_3 = arith.constant 0 : index
    %c0_4 = arith.constant 0 : index
    %5 = vector.load %arg3[%c0_3, %c0_4] : memref<8x256xf32, #tpu.memory_space<vmem>>, vector<8x256xf32>
    %cst_5 = arith.constant dense<0.000000e+00> : vector<8x16xf32>
    %6 = tpu.matmul %5, %4, %cst_5 {dimension_numbers = #tpu.dot_dimension_numbers<[1], [1], [0], [0], [0, 0, 1, 0], [], []>} : vector<8x256xf32>, vector<16x256xf32>, vector<8x16xf32> -> vector<8x16xf32>
    %c0_6 = arith.constant 0 : index
    %c0_7 = arith.constant 0 : index
    %7 = vector.load %arg4[%c0_6, %c0_7] : memref<8x16xf32, #tpu.memory_space<vmem>>, vector<8x16xf32>
    tpu.vector_store %arg4[%c0_6, %c0_7], %6 {strides = array<i32>} : memref<8x16xf32, #tpu.memory_space<vmem>>, vector<8x16xf32>,
    return
  }
  func.func @transform_0(%arg0: i32) -> (i32, i32) {
    %c0_i32 = arith.constant 0 : i32
    %c0_i32_0 = arith.constant 0 : i32
    return %arg0, %c0_i32 : i32, i32
  }
  func.func @transform_1(%arg0: i32) -> (i32, i32) {
    %c0_i32 = arith.constant 0 : i32
    %c0_i32_0 = arith.constant 0 : i32
    %c0_i32_1 = arith.constant 0 : i32
    return %c0_i32, %c0_i32_0 : i32, i32
  }
  func.func @transform_2(%arg0: i32) -> (i32, i32) {
    %c0_i32 = arith.constant 0 : i32
    %c0_i32_0 = arith.constant 0 : i32
    %c0_i32_1 = arith.constant 0 : i32
    return %c0_i32, %c0_i32_0 : i32, i32
  }
  func.func @transform_3(%arg0: i32) -> (i32, i32) {
    %c0_i32 = arith.constant 0 : i32
    %c0_i32_0 = arith.constant 0 : i32
    return %c0_i32, %arg0 : i32, i32
  }
}

</mosaic_0001>

<llo_original>
// kernel: tpu_custom_call.1
$region0: #{tpu_custom_call.1}
  #allocation0 [shape = 'u32[]', space=smem, size = 0x4, offset = 0x4, fixed_abs, tag = 'smem constant byte address 0x4 - core index']
  #allocation1 [shape = 'u32[144,128]{1,0:T(1,128)}', space=vmem, size = 0x12000, scoped, tag = 'internal scratch']
  %s0 = inlined_call_operand.hbm [shape: bf16[16,256], index: 0, kind: input, shape index: {}]
  %s1 = inlined_call_operand.hbm [shape: bf16[256,256], index: 1, kind: input, shape index: {}]
  %s2 = inlined_call_operand.hbm [shape: f32[8,256], index: 2, kind: input, shape index: {}]
  %s3 = inlined_call_operand.hbm [shape: f32[8,16], index: 3, kind: output, shape index: {}]
  %s4 = sld [smem:[#allocation0]]
  $region34: #{tpu_custom_call.1} parent=0
    _
  %s6 = ssub.s32 1, %s4
  %s7 = scalar_select 0, %s6, %s4
  $region1: #{tpu_custom_call.1} parent=0
    #allocation2 [shape = 'u8[8192]{0}', space=vmem, size = 0x2000, scoped, tag = 'input window, operand 0, single buffered']
    #allocation3 [shape = 's32[1]{0}', space=sflag, size = 0x4, scoped, tag = 'scoped memory for tpu_custom_call.1']
    #allocation4 [shape = 's32[1]{0}', space=sflag, size = 0x4, scoped, tag = 'scoped memory for tpu_custom_call.1']
    #allocation5 [shape = 'u8[131072]{0}', space=vmem, size = 0x20000, scoped, tag = 'input window, operand 1, single buffered']
    #allocation6 [shape = 's32[1]{0}', space=sflag, size = 0x4, scoped, tag = 'scoped memory for tpu_custom_call.1']
    #allocation7 [shape = 'u8[8192]{0}', space=vmem, size = 0x2000, scoped, tag = 'input window, operand 2, single buffered']
    #allocation8 [shape = 'u8[4096]{0}', space=vmem, size = 0x1000, scoped, tag = 'output window, operand 0, single buffered']
    %8 = vsyncpa [#allocation3], 0
    %9 = vsyncpa [#allocation6], 0
    %10 = vsyncpa [#allocation4], 0
    // Predicated region
    $region2: #{tpu_custom_call.1} parent=1 // pred_check
      _
    $region3: #{tpu_custom_call.1} parent=1 // pred_check_branch
      %12 = sbr.rel (0) target = $region5
    $region4: #{tpu_custom_call.1} parent=1 // pred_region
      %s14 = ssub.s32 256, 256
      %15 = vsyncadd [#allocation3], %s14
      %s16 = sshll.u32 [#allocation2], 4
      %s17 = int_to_ptr.vmem [resolvable:$true] %s16
      %22 = dma.hbm_to_vmem [thread:$0]  %s0, 256, %s17, [#allocation3], 128, 128, 8
    $region5: #{tpu_custom_call.1} parent=1 // pred_fallthru
      _
    // Predicated region
    $region6: #{tpu_custom_call.1} parent=1 // pred_check
      _
    $region7: #{tpu_custom_call.1} parent=1 // pred_check_branch
      %24 = sbr.rel (0) target = $region9
    $region8: #{tpu_custom_call.1} parent=1 // pred_region
      %s26 = ssub.s32 4096, 4096
      %27 = vsyncadd [#allocation6], %s26
      %s28 = sshll.u32 [#allocation5], 4
      %s29 = int_to_ptr.vmem [resolvable:$true] %s28
      %34 = dma.hbm_to_vmem [thread:$0]  %s1, 4096, %s29, [#allocation6], 128, 128, 8
    $region9: #{tpu_custom_call.1} parent=1 // pred_fallthru
      _
    // Predicated region
    $region10: #{tpu_custom_call.1} parent=1 // pred_check
      _
    $region11: #{tpu_custom_call.1} parent=1 // pred_check_branch
      %36 = sbr.rel (0) target = $region13
    $region12: #{tpu_custom_call.1} parent=1 // pred_region
      %s38 = ssub.s32 256, 256
      %39 = vsyncadd [#allocation6], %s38
      %s41 = sshll.u32 [#allocation7], 4
      %s42 = int_to_ptr.vmem [resolvable:$true] %s41
      %44 = dma.hbm_to_vmem [thread:$0]  %s2, 256, %s42, [#allocation6]
    $region13: #{tpu_custom_call.1} parent=1 // pred_fallthru
      _
    // Predicated region
    $region14: #{tpu_custom_call.1} parent=1 // pred_check
      _
    $region15: #{tpu_custom_call.1} parent=1 // pred_check_branch
      %46 = sbr.rel (0) target = $region17
    $region16: #{tpu_custom_call.1} parent=1 // pred_region
      %47 = dma.done [#allocation3], 256
    $region17: #{tpu_custom_call.1} parent=1 // pred_fallthru
      _
    // Predicated region
    $region18: #{tpu_custom_call.1} parent=1 // pred_check
      _
    $region19: #{tpu_custom_call.1} parent=1 // pred_check_branch
      %49 = sbr.rel (0) target = $region21
    $region20: #{tpu_custom_call.1} parent=1 // pred_region
      %50 = dma.done [#allocation6], 4096
    $region21: #{tpu_custom_call.1} parent=1 // pred_fallthru
      _
    // Predicated region
    $region22: #{tpu_custom_call.1} parent=1 // pred_check
      _
    $region23: #{tpu_custom_call.1} parent=1 // pred_check_branch
      %52 = sbr.rel (0) target = $region25
    $region24: #{tpu_custom_call.1} parent=1 // pred_region
      %53 = dma.done [#allocation6], 256
    $region25: #{tpu_custom_call.1} parent=1 // pred_fallthru
      _
    %v54 = vld [vmem:[#allocation2] sm:$0xff]
    %v55 = vld [vmem:[#allocation2 + $0x8] sm:$0xff]
    %v56 = vld [vmem:[#allocation5] sm:$0xff]
    %v57 = vld [vmem:[#allocation5 + $0x8] sm:$0xff]
    %v58 = vld [vmem:[#allocation5 + $0x10] sm:$0xff]
    %v59 = vld [vmem:[#allocation5 + $0x18] sm:$0xff]
    %v60 = vld [vmem:[#allocation5 + $0x20] sm:$0xff]
    %v61 = vld [vmem:[#allocation5 + $0x28] sm:$0xff]
    %v62 = vld [vmem:[#allocation5 + $0x30] sm:$0xff]
    %v63 = vld [vmem:[#allocation5 + $0x38] sm:$0xff]
    %v64 = vld [vmem:[#allocation5 + $0x40] sm:$0xff]
    %v65 = vld [vmem:[#allocation5 + $0x48] sm:$0xff]
    %v66 = vld [vmem:[#allocation5 + $0x50] sm:$0xff]
    %v67 = vld [vmem:[#allocation5 + $0x58] sm:$0xff]
    %v68 = vld [vmem:[#allocation5 + $0x60] sm:$0xff]
    %v69 = vld [vmem:[#allocation5 + $0x68] sm:$0xff]
    %v70 = vld [vmem:[#allocation5 + $0x70] sm:$0xff]
    %v71 = vld [vmem:[#allocation5 + $0x78] sm:$0xff]
    %v72 = vld [vmem:[#allocation5 + $0x80] sm:$0xff]
    %v73 = vld [vmem:[#allocation5 + $0x88] sm:$0xff]
    %v74 = vld [vmem:[#allocation5 + $0x90] sm:$0xff]
    %v75 = vld [vmem:[#allocation5 + $0x98] sm:$0xff]
    %v76 = vld [vmem:[#allocation5 + $0xa0] sm:$0xff]
    %v77 = vld [vmem:[#allocation5 + $0xa8] sm:$0xff]
    %v78 = vld [vmem:[#allocation5 + $0xb0] sm:$0xff]
    %v79 = vld [vmem:[#allocation5 + $0xb8] sm:$0xff]
    %v80 = vld [vmem:[#allocation5 + $0xc0] sm:$0xff]
    %v81 = vld [vmem:[#allocation5 + $0xc8] sm:$0xff]
    %v82 = vld [vmem:[#allocation5 + $0xd0] sm:$0xff]
    %v83 = vld [vmem:[#allocation5 + $0xd8] sm:$0xff]
    %v84 = vld [vmem:[#allocation5 + $0xe0] sm:$0xff]
    %v85 = vld [vmem:[#allocation5 + $0xe8] sm:$0xff]
    %v86 = vld [vmem:[#allocation5 + $0xf0] sm:$0xff]
    %v87 = vld [vmem:[#allocation5 + $0xf8] sm:$0xff]
    %v90 = vunpack.c.l.b16 %v54
    %v91 = vunpack.c.h.b16 %v54
    %v92 = vunpack.c.l.b16 %v55
    %v93 = vunpack.c.h.b16 %v55
    %v94 = vpack.c.b16 %v92, %v90
    %v95 = vpack.c.b16 %v93, %v91
    %v130 = vunpack.c.l.b16 %v56
    %v131 = vunpack.c.h.b16 %v56
    %v132 = vunpack.c.l.b16 %v57
    %v133 = vunpack.c.h.b16 %v57
    %v134 = vunpack.c.l.b16 %v58
    %v135 = vunpack.c.h.b16 %v58
    %v136 = vunpack.c.l.b16 %v59
    %v137 = vunpack.c.h.b16 %v59
    %v138 = vunpack.c.l.b16 %v60
    %v139 = vunpack.c.h.b16 %v60
    %v140 = vunpack.c.l.b16 %v61
    %v141 = vunpack.c.h.b16 %v61
    %v142 = vunpack.c.l.b16 %v62
    %v143 = vunpack.c.h.b16 %v62
    %v144 = vunpack.c.l.b16 %v63
    %v145 = vunpack.c.h.b16 %v63
    %v146 = vunpack.c.l.b16 %v64
    %v147 = vunpack.c.h.b16 %v64
    %v148 = vunpack.c.l.b16 %v65
    %v149 = vunpack.c.h.b16 %v65
    %v150 = vunpack.c.l.b16 %v66
    %v151 = vunpack.c.h.b16 %v66
    %v152 = vunpack.c.l.b16 %v67
    %v153 = vunpack.c.h.b16 %v67
    %v154 = vunpack.c.l.b16 %v68
    %v155 = vunpack.c.h.b16 %v68
    %v156 = vunpack.c.l.b16 %v69
    %v157 = vunpack.c.h.b16 %v69
    %v158 = vunpack.c.l.b16 %v70
    %v159 = vunpack.c.h.b16 %v70
    %v160 = vunpack.c.l.b16 %v71
    %v161 = vunpack.c.h.b16 %v71
    %v162 = vunpack.c.l.b16 %v72
    %v163 = vunpack.c.h.b16 %v72
    %v164 = vunpack.c.l.b16 %v73
    %v165 = vunpack.c.h.b16 %v73
    %v166 = vunpack.c.l.b16 %v74
    %v167 = vunpack.c.h.b16 %v74
    %v168 = vunpack.c.l.b16 %v75
    %v169 = vunpack.c.h.b16 %v75
    %v170 = vunpack.c.l.b16 %v76
    %v171 = vunpack.c.h.b16 %v76
    %v172 = vunpack.c.l.b16 %v77
    %v173 = vunpack.c.h.b16 %v77
    %v174 = vunpack.c.l.b16 %v78
    %v175 = vunpack.c.h.b16 %v78
    %v176 = vunpack.c.l.b16 %v79
    %v177 = vunpack.c.h.b16 %v79
    %v178 = vunpack.c.l.b16 %v80
    %v179 = vunpack.c.h.b16 %v80
    %v180 = vunpack.c.l.b16 %v81
    %v181 = vunpack.c.h.b16 %v81
    %v182 = vunpack.c.l.b16 %v82
    %v183 = vunpack.c.h.b16 %v82
    %v184 = vunpack.c.l.b16 %v83
    %v185 = vunpack.c.h.b16 %v83
    %v186 = vunpack.c.l.b16 %v84
    %v187 = vunpack.c.h.b16 %v84
    %v188 = vunpack.c.l.b16 %v85
    %v189 = vunpack.c.h.b16 %v85
    %v190 = vunpack.c.l.b16 %v86
    %v191 = vunpack.c.h.b16 %v86
    %v192 = vunpack.c.l.b16 %v87
    %v193 = vunpack.c.h.b16 %v87
    %v194 = vpack.c.b16 %v132, %v130
    %v195 = vpack.c.b16 %v133, %v131
    %v196 = vpack.c.b16 %v136, %v134
    %v197 = vpack.c.b16 %v137, %v135
    %v198 = vpack.c.b16 %v140, %v138
    %v199 = vpack.c.b16 %v141, %v139
    %v200 = vpack.c.b16 %v144, %v142
    %v201 = vpack.c.b16 %v145, %v143
    %v202 = vpack.c.b16 %v148, %v146
    %v203 = vpack.c.b16 %v149, %v147
    %v204 = vpack.c.b16 %v152, %v150
    %v205 = vpack.c.b16 %v153, %v151
    %v206 = vpack.c.b16 %v156, %v154
    %v207 = vpack.c.b16 %v157, %v155
    %v208 = vpack.c.b16 %v160, %v158
    %v209 = vpack.c.b16 %v161, %v159
    %v210 = vpack.c.b16 %v164, %v162
    %v211 = vpack.c.b16 %v165, %v163
    %v212 = vpack.c.b16 %v168, %v166
    %v213 = vpack.c.b16 %v169, %v167
    %v214 = vpack.c.b16 %v172, %v170
    %v215 = vpack.c.b16 %v173, %v171
    %v216 = vpack.c.b16 %v176, %v174
    %v217 = vpack.c.b16 %v177, %v175
    %v218 = vpack.c.b16 %v180, %v178
    %v219 = vpack.c.b16 %v181, %v179
    %v220 = vpack.c.b16 %v184, %v182
    %v221 = vpack.c.b16 %v185, %v183
    %v222 = vpack.c.b16 %v188, %v186
    %v223 = vpack.c.b16 %v189, %v187
    %v224 = vpack.c.b16 %v192, %v190
    %v225 = vpack.c.b16 %v193, %v191
    %258 = vmatprep.subr.bf16.mxu0 %v209
    %259 = vmatpush1.bf16.msra.mxu0 %v208
    %260 = vmatprep.subr.bf16.mxu0 %v207
    %261 = vmatpush1.bf16.msra.mxu0 %v206
    %262 = vmatprep.subr.bf16.mxu0 %v205
    %263 = vmatpush1.bf16.msra.mxu0 %v204
    %264 = vmatprep.subr.bf16.mxu0 %v203
    %265 = vmatpush1.bf16.msra.mxu0 %v202
    %266 = vmatprep.subr.bf16.mxu0 %v201
    %267 = vmatpush1.bf16.msra.mxu0 %v200
    %268 = vmatprep.subr.bf16.mxu0 %v199
    %269 = vmatpush1.bf16.msra.mxu0 %v198
    %270 = vmatprep.subr.bf16.mxu0 %v197
    %271 = vmatpush1.bf16.msra.mxu0 %v196
    %272 = vmatprep.subr.bf16.mxu0 %v195
    %273 = vmatpush1.bf16.msra.mxu0 %v194
    %274 = vmatprep.subr.bf16.mxu0 %v225
    %275 = vmatpush2.bf16.msra.mxu0 %v224
    %276 = vmatprep.subr.bf16.mxu0 %v223
    %277 = vmatpush2.bf16.msra.mxu0 %v222
    %278 = vmatprep.subr.bf16.mxu0 %v221
    %279 = vmatpush2.bf16.msra.mxu0 %v220
    %280 = vmatprep.subr.bf16.mxu0 %v219
    %281 = vmatpush2.bf16.msra.mxu0 %v218
    %282 = vmatprep.subr.bf16.mxu0 %v217
    %283 = vmatpush2.bf16.msra.mxu0 %v216
    %284 = vmatprep.subr.bf16.mxu0 %v215
    %285 = vmatpush2.bf16.msra.mxu0 %v214
    %286 = vmatprep.subr.bf16.mxu0 %v213
    %287 = vmatpush2.bf16.msra.mxu0 %v212
    %288 = vmatprep.subr.bf16.mxu0 %v211
    %289 = vmatpush2.bf16.msra.mxu0 %v210
    %290 = vmatprep.mubr.bf16.mxu0 %v95
    %291 = vmatmul.mubr.bf16.gmra.mxu0 %v94
    %v292 = vpop.f32.mrf.mxu0
    %v293 = vadd.f32 0.0, %v292
    %v294 = vpop.f32.mrf.mxu0
    %v295 = vadd.f32 0.0, %v294
    %v296 = vpop.f32.mrf.mxu0
    %v297 = vadd.f32 0.0, %v296
    %v298 = vpop.f32.mrf.mxu0
    %v299 = vadd.f32 0.0, %v298
    %300 = vdwg.mxu0
    %v301 = vunpack.c.l.bf16 %v54
    %v302 = vunpack.c.h.bf16 %v54
    %v303 = vunpack.c.l.bf16 %v55
    %v304 = vunpack.c.h.bf16 %v55
    %v305 = vmul.f32 %v301, %v293
    %v306 = vmul.f32 %v302, %v295
    %v307 = vmul.f32 %v303, %v297
    %v308 = vmul.f32 %v304, %v299
    %v309 = vld [vmem:[#allocation7] sm:$0xff]
    %v310 = vld [vmem:[#allocation7 + $0x8] sm:$0xff]
    %311 = vmatprep.subr.mxu0 0.0
    %312 = vmatpush1.xpose.msra.mxu0 0.0
    %313 = vmatprep.subr.mxu0 0.0
    %314 = vmatpush1.xpose.msra.mxu0 0.0
    %315 = vmatprep.subr.mxu0 0.0
    %316 = vmatpush1.xpose.msra.mxu0 0.0
    %317 = vmatprep.subr.mxu0 0.0
    %318 = vmatpush1.xpose.msra.mxu0 0.0
    %319 = vmatprep.subr.mxu0 0.0
    %320 = vmatpush1.xpose.msra.mxu0 0.0
    %321 = vmatprep.subr.mxu0 0.0
    %322 = vmatpush1.xpose.msra.mxu0 0.0
    %323 = vmatprep.subr.mxu0 0.0
    %324 = vmatpush1.xpose.msra.mxu0 0.0
    %325 = vmatprep.subr.mxu0 0.0
    %326 = vmatpush1.xpose.msra.mxu0 0.0
    %327 = vmatprep.subr.mxu0 0.0
    %328 = vmatpush1.xpose.msra.mxu0 0.0
    %329 = vmatprep.subr.mxu0 0.0
    %330 = vmatpush1.xpose.msra.mxu0 0.0
    %331 = vmatprep.subr.mxu0 0.0
    %332 = vmatpush1.xpose.msra.mxu0 0.0
    %333 = vmatprep.subr.mxu0 0.0
    %334 = vmatpush1.xpose.msra.mxu0 0.0
    %335 = vmatprep.subr.mxu0 0.0
    %336 = vmatpush1.xpose.msra.mxu0 0.0
    %337 = vmatprep.subr.mxu0 0.0
    %338 = vmatpush1.xpose.msra.mxu0 0.0
    %339 = vmatprep.subr.mxu0 %v308
    %340 = vmatpush1.xpose.msra.mxu0 %v307
    %341 = vmatprep.subr.mxu0 %v306
    %342 = vmatpush1.xpose.msra.mxu0 %v305
    %343 = vmatprep.subr.mxu0 0.0
    %344 = vmatpush2.xpose.msra.mxu0 0.0
    %345 = vmatprep.subr.mxu0 0.0
    %346 = vmatpush2.xpose.msra.mxu0 0.0
    %347 = vmatprep.subr.mxu0 0.0
    %348 = vmatpush2.xpose.msra.mxu0 0.0
    %349 = vmatprep.subr.mxu0 0.0
    %350 = vmatpush2.xpose.msra.mxu0 0.0
    %351 = vmatprep.subr.mxu0 0.0
    %352 = vmatpush2.xpose.msra.mxu0 0.0
    %353 = vmatprep.subr.mxu0 0.0
    %354 = vmatpush2.xpose.msra.mxu0 0.0
    %355 = vmatprep.subr.mxu0 0.0
    %356 = vmatpush2.xpose.msra.mxu0 0.0
    %357 = vmatprep.subr.mxu0 0.0
    %358 = vmatpush2.xpose.msra.mxu0 0.0
    %359 = vmatprep.subr.mxu0 0.0
    %360 = vmatpush2.xpose.msra.mxu0 0.0
    %361 = vmatprep.subr.mxu0 0.0
    %362 = vmatpush2.xpose.msra.mxu0 0.0
    %363 = vmatprep.subr.mxu0 0.0
    %364 = vmatpush2.xpose.msra.mxu0 0.0
    %365 = vmatprep.subr.mxu0 0.0
    %366 = vmatpush2.xpose.msra.mxu0 0.0
    %367 = vmatprep.subr.mxu0 0.0
    %368 = vmatpush2.xpose.msra.mxu0 0.0
    %369 = vmatprep.subr.mxu0 0.0
    %370 = vmatpush2.xpose.msra.mxu0 0.0
    %371 = vmatprep.subr.mxu0 0.0
    %372 = vmatpush2.xpose.msra.mxu0 0.0
    %373 = vmatprep.subr.mxu0 0.0
    %374 = vmatpush2.xpose.msra.mxu0 0.0
    %375 = vmatprep.mubr.f32.mxu0 %v310
    %376 = vmatmul.mubr.f32.gmra.mxu0 %v309
    %v377 = vpop.f32.mrf.mxu0
    %v378 = vadd.f32 0.0, %v377
    %v379 = vpop.f32.mrf.mxu0
    %380 = vdwg.mxu0
    %vm381 = vcmask 130048
    %382 = vst.msk [vmem:[#allocation8] sm:$0xff] %vm381, %v378
    // Predicated region
    $region26: #{tpu_custom_call.1} parent=1 // pred_check
      _
    $region27: #{tpu_custom_call.1} parent=1 // pred_check_branch
      %384 = sbr.rel (0) target = $region29
    $region28: #{tpu_custom_call.1} parent=1 // pred_region
      %s386 = ssub.s32 128, 128
      %387 = vsyncadd [#allocation4], %s386
      %s389 = sshll.u32 [#allocation8], 4
      %s390 = int_to_ptr.vmem [resolvable:$true] %s389
      %392 = dma.vmem_to_hbm [thread:$0]  %s390, 128, %s3, [#allocation4]
    $region29: #{tpu_custom_call.1} parent=1 // pred_fallthru
      _
    // Predicated region
    $region30: #{tpu_custom_call.1} parent=1 // pred_check
      _
    $region31: #{tpu_custom_call.1} parent=1 // pred_check_branch
      %394 = sbr.rel (0) target = $region33
    $region32: #{tpu_custom_call.1} parent=1 // pred_region
      %395 = dma.done [#allocation4], 128
    $region33: #{tpu_custom_call.1} parent=1 // pred_fallthru
      _
    %396 = vsyncpa [#allocation3], 1
    %397 = vsyncpa [#allocation6], 1
    %398 = vsyncpa [#allocation4], 1

</llo_original>
